<compile_context>
chip_gen: v7x
topology: tpu7x:2x2x1
jax: 0.10.0
libtpu: 0.0.40
codegen_flags: <defaults>
</compile_context>

<pallas_src>
import functools

import jax
import jax.numpy as jnp
from jax import lax
from jax.experimental import pallas as pl
from jax.experimental.pallas import tpu as pltpu


def _loss_kernel(cls0_ref, cls1_ref, h0_ref, h1_ref, tgt_ref, tv_ref, ind_ref,
                 u_ref, y_ref, loss_ref, u_out_ref, y_out_ref, *,
                 m, alpha, beta, inv_2b, inv_bk, inv_total, assume_onehot):
    f32 = jnp.float32
    # Upcast once on load (f32 is the fast VPU/EUP path, esp. on v5e).
    cls0 = cls0_ref[...].astype(f32)          # [B, C]
    cls1 = cls1_ref[...].astype(f32)          # [B, C]
    h0 = h0_ref[...].astype(f32)              # [B, K]
    h1 = h1_ref[...].astype(f32)              # [B, K]
    tgt = tgt_ref[...].astype(f32)            # [B, C]
    tv = tv_ref[...].astype(f32)              # [C, K]

    B, C = tgt.shape

    if assume_onehot:
        # Single-label one-hot target: argmax -> one-hot is the identity.
        onehot = tgt
    else:
        # Fallback: torch.argmax(target, dim=1) semantics (first max wins).
        iota_c = lax.broadcasted_iota(jnp.int32, (B, C), 1)
        is_max = tgt == jnp.max(tgt, axis=1, keepdims=True)
        labels = jnp.min(jnp.where(is_max, iota_c, C), axis=1, keepdims=True)
        onehot = (iota_c == labels).astype(f32)

    # --- cross entropy: 0.5*CE(cls0, labels) + 0.5*CE(cls1, labels), each with
    #     mean reduction over B  ==  (sum(ce0) + sum(ce1)) / (2B).
    def _ce_sum(logits):
        mx = jnp.max(logits, axis=1, keepdims=True)
        lse = jnp.log(jnp.sum(jnp.exp(logits - mx), axis=1, keepdims=True)) + mx
        picked = jnp.sum(onehot * logits, axis=1, keepdims=True)
        return jnp.sum(lse - picked)

    cls_loss = (_ce_sum(cls0) + _ce_sum(cls1)) * inv_2b       # inv_2b = 1/(2B)

    # --- label2center (single-label branch): target_vectors[argmax(y)].
    # One padded MXU matmul; the MXU is otherwise idle here so this frees the
    # VPU/XLU slots the old unrolled select-accumulate was burning.
    center = jnp.dot(onehot, tv, preferred_element_type=f32)  # [B, K]

    # --- polarization hinge on both halves (shared center):
    #     pol_conv + pol_trans == (sum hinge0 + sum hinge1) / (B*K).
    hinge_sum = (jnp.sum(jnp.maximum(m - h0 * center, 0.0)) +
                 jnp.sum(jnp.maximum(m - h1 * center, 0.0)))
    pol_loss = hinge_sum * inv_bk                             # inv_bk = 1/(B*K)

    # --- balanced probability loss over sign(cat([h0, h1], dim=1)):
    # counts over the two [B, K] halves equal counts over [B, 2K].
    # (h < 0) <=> sign == -1, (h > 0) <=> sign == +1; zeros excluded (torch.sign).
    n_m1 = jnp.sum((h0 < 0.0).astype(f32)) + jnp.sum((h1 < 0.0).astype(f32))
    n_p1 = jnp.sum((h0 > 0.0).astype(f32)) + jnp.sum((h1 > 0.0).astype(f32))
    p_m1 = n_m1 * inv_total                                   # inv_total = 1/(2B*K)
    p_p1 = n_p1 * inv_total
    # Exact reference formula (asymmetric sign; NaN if a probability is 0 —
    # identical behavior to the PyTorch module).
    b_loss = jnp.abs(-p_m1 * jnp.log2(p_m1) + p_p1 * jnp.log2(p_p1))

    loss_ref[0, 0] = cls_loss + alpha * pol_loss + beta * b_loss

    # --- stateful writeback (net effect of forward): U[ind] = hash_out[1],
    #     Y[ind] = target.  Vectorized scatter: one-hot row-selection matrix
    #     built from an iota compare, rows gathered with the MXU, untouched
    #     rows passed through.  (ind holds distinct minibatch indices.)
    ind_row = ind_ref[...]                                    # [1, B] int32
    n_train = u_ref.shape[0]
    row_iota = lax.broadcasted_iota(jnp.int32, (n_train, B), 0)
    scat = (row_iota == ind_row).astype(f32)                  # [num_train, B]
    written = jnp.sum(scat, axis=1, keepdims=True) > 0.0      # [num_train, 1]
    u_new = jnp.dot(scat, h1, preferred_element_type=f32)     # [num_train, K]
    y_new = jnp.dot(scat, tgt, preferred_element_type=f32)    # [num_train, C]
    u_out_ref[...] = jnp.where(written, u_new,
                               u_ref[...].astype(f32)).astype(u_out_ref.dtype)
    y_out_ref[...] = jnp.where(written, y_new,
                               y_ref[...].astype(f32)).astype(y_out_ref.dtype)


def _my_loss_forward(hash_out, cls_out, target, ind, U, Y, target_vectors,
                     *, m, alpha, beta, assume_onehot=True):
    """Returns (scalar loss, updated U, updated Y)."""
    hash0, hash1 = hash_out
    cls0, cls1 = cls_out
    B, C = target.shape
    K = hash0.shape[1]

    # ind as a lane vector so the kernel can build the scatter one-hot with a
    # single vectorized compare (SMEM scalar-prefetch would force a scalar loop).
    ind_2d = ind.reshape(1, B).astype(jnp.int32)

    vmem = pl.BlockSpec(memory_space=pltpu.MemorySpace.VMEM)
    smem = pl.BlockSpec(memory_space=pltpu.MemorySpace.SMEM)

    kernel = functools.partial(
        _loss_kernel,
        m=float(m), alpha=float(alpha), beta=float(beta),
        inv_2b=float(0.5 / B),            # 1/(2B)   -> CE term
        inv_bk=float(1.0 / (B * K)),      # 1/(B*K)  -> pol_conv + pol_trans
        inv_total=float(1.0 / (2 * B * K)),  # 1/(2B*K) -> balanced prob
        assume_onehot=bool(assume_onehot))

    # TODO(synk): alias U/Y with input_output_aliases inside pallas_call once
    # the operand-index convention is pinned down; jit-level donation of U/Y
    # already lets XLA reuse their buffers for the new outputs.
    loss, U_new, Y_new = pl.pallas_call(
        kernel,
        out_shape=(jax.ShapeDtypeStruct((1, 1), jnp.float32),
                   jax.ShapeDtypeStruct(U.shape, U.dtype),
                   jax.ShapeDtypeStruct(Y.shape, Y.dtype)),
        in_specs=[vmem] * 9,
        out_specs=(smem, vmem, vmem),
    )(cls0, cls1, hash0, hash1, target, target_vectors, ind_2d, U, Y)

    return loss[0, 0], U_new, Y_new


# Single fused executable: glue + kernel; U/Y buffers are donated.
my_loss_forward = jax.jit(
    _my_loss_forward,
    static_argnames=("m", "alpha", "beta", "assume_onehot"),
    donate_argnums=(4, 5))


def get_target_vectors(key, n_class, bit_half, p=0.5):
    # Deterministic stand-in for the torch random.sample construction:
    # exactly int(bit_half * p) entries per row are -1, the rest +1.
    n_neg = int(bit_half * p)
    scores = jax.random.uniform(key, (n_class, bit_half))
    order = jnp.argsort(scores, axis=1)
    ranks = jnp.argsort(order, axis=1)
    return jnp.where(ranks < n_neg, -1.0, 1.0).astype(jnp.float32)


# TODO(synk): multi-label label2center branch (y @ target_vectors with random
# center fill where center_sum == 0) is not implemented; single-label config
# is assumed (assume_onehot=True uses target directly as the one-hot).

if __name__ == "__main__":
    # config: n_class=4, bit=32, m=0.3, alpha=0.1, beta=0.1, p=0.5, num_train=16
    B, n_class, bit = 8, 4, 32
    K = bit // 2
    m, alpha, beta, p = 0.3, 0.1, 0.1, 0.5
    num_train = 16

    key = jax.random.PRNGKey(0)
    k0, k1, k2, k3, k4, k5 = jax.random.split(key, 6)

    hash0 = jax.random.normal(k0, (B, K), jnp.float32)
    hash1 = jax.random.normal(k1, (B, K), jnp.float32)
    cls0 = jax.random.normal(k2, (B, n_class), jnp.float32)
    cls1 = jax.random.normal(k3, (B, n_class), jnp.float32)
    labels = jax.random.randint(k4, (B,), 0, n_class)
    target = jax.nn.one_hot(labels, n_class, dtype=jnp.float32)

    target_vectors = get_target_vectors(k5, n_class, K, p)

    U = jnp.zeros((num_train, K), jnp.float32)
    Y = jnp.zeros((num_train, n_class), jnp.float32)
    ind = jnp.arange(B, dtype=jnp.int32)

    loss, U, Y = my_loss_forward((hash0, hash1), (cls0, cls1), target, ind,
                                 U, Y, target_vectors,
                                 m=m, alpha=alpha, beta=beta)
    jax.block_until_ready((loss, U, Y))
    print("KERNEL_OK")
</pallas_src>

<mosaic_0001>
module attributes {stable_mosaic.version = 11 : i64} {
  func.func @_loss_kernel(%arg0: memref<8x4xf32, #tpu.memory_space<vmem>>, %arg1: memref<8x4xf32, #tpu.memory_space<vmem>>, %arg2: memref<8x16xf32, #tpu.memory_space<vmem>>, %arg3: memref<8x16xf32, #tpu.memory_space<vmem>>, %arg4: memref<8x4xf32, #tpu.memory_space<vmem>>, %arg5: memref<4x16xf32, #tpu.memory_space<vmem>>, %arg6: memref<1x8xi32, #tpu.memory_space<vmem>>, %arg7: memref<16x16xf32, #tpu.memory_space<vmem>>, %arg8: memref<16x4xf32, #tpu.memory_space<vmem>>, %arg9: memref<1x1xf32, #tpu.memory_space<smem>>, %arg10: memref<16x16xf32, #tpu.memory_space<vmem>>, %arg11: memref<16x4xf32, #tpu.memory_space<vmem>>) attributes {dimension_semantics = [], scalar_prefetch = 0 : i64, scratch_operands = 0 : i64, tpu.core_type = #tpu.core_type<tc>} {
    %c0 = arith.constant 0 : index
    %c0_0 = arith.constant 0 : index
    %0 = vector.load %arg0[%c0, %c0_0] : memref<8x4xf32, #tpu.memory_space<vmem>>, vector<8x4xf32>
    %c0_1 = arith.constant 0 : index
    %c0_2 = arith.constant 0 : index
    %1 = vector.load %arg1[%c0_1, %c0_2] : memref<8x4xf32, #tpu.memory_space<vmem>>, vector<8x4xf32>
    %c0_3 = arith.constant 0 : index
    %c0_4 = arith.constant 0 : index
    %2 = vector.load %arg2[%c0_3, %c0_4] : memref<8x16xf32, #tpu.memory_space<vmem>>, vector<8x16xf32>
    %c0_5 = arith.constant 0 : index
    %c0_6 = arith.constant 0 : index
    %3 = vector.load %arg3[%c0_5, %c0_6] : memref<8x16xf32, #tpu.memory_space<vmem>>, vector<8x16xf32>
    %c0_7 = arith.constant 0 : index
    %c0_8 = arith.constant 0 : index
    %4 = vector.load %arg4[%c0_7, %c0_8] : memref<8x4xf32, #tpu.memory_space<vmem>>, vector<8x4xf32>
    %c0_9 = arith.constant 0 : index
    %c0_10 = arith.constant 0 : index
    %5 = vector.load %arg5[%c0_9, %c0_10] : memref<4x16xf32, #tpu.memory_space<vmem>>, vector<4x16xf32>
    %cst = arith.constant dense<0xFF800000> : vector<8xf32>
    %6 = vector.multi_reduction <maximumf>, %0, %cst [1] : vector<8x4xf32> to vector<8xf32>
    %7 = vector.shape_cast %6 : vector<8xf32> to vector<8x1xf32>
    %8 = vector.broadcast %7 : vector<8x1xf32> to vector<8x4xf32>
    %9 = arith.subf %0, %8 : vector<8x4xf32>
    %10 = math.exp %9 : vector<8x4xf32>
    %cst_11 = arith.constant dense<0.000000e+00> : vector<8xf32>
    %11 = vector.multi_reduction <add>, %10, %cst_11 [1] : vector<8x4xf32> to vector<8xf32>
    %12 = vector.shape_cast %11 : vector<8xf32> to vector<8x1xf32>
    %13 = math.log %12 : vector<8x1xf32>
    %14 = arith.addf %13, %7 : vector<8x1xf32>
    %15 = arith.mulf %4, %0 : vector<8x4xf32>
    %cst_12 = arith.constant dense<0.000000e+00> : vector<8xf32>
    %16 = vector.multi_reduction <add>, %15, %cst_12 [1] : vector<8x4xf32> to vector<8xf32>
    %17 = vector.shape_cast %16 : vector<8xf32> to vector<8x1xf32>
    %18 = arith.subf %14, %17 : vector<8x1xf32>
    %19 = vector.shape_cast %18 : vector<8x1xf32> to vector<1x8x1xf32>
    %cst_13 = arith.constant dense<0.000000e+00> : vector<1xf32>
    %20 = vector.multi_reduction <add>, %19, %cst_13 [1, 2] : vector<1x8x1xf32> to vector<1xf32>
    %21 = vector.shape_cast %20 : vector<1xf32> to vector<1x1x1xf32>
    %22 = vector.extract %21[0, 0, 0] : f32 from vector<1x1x1xf32>
    %cst_14 = arith.constant dense<0xFF800000> : vector<8xf32>
    %23 = vector.multi_reduction <maximumf>, %1, %cst_14 [1] : vector<8x4xf32> to vector<8xf32>
    %24 = vector.shape_cast %23 : vector<8xf32> to vector<8x1xf32>
    %25 = vector.broadcast %24 : vector<8x1xf32> to vector<8x4xf32>
    %26 = arith.subf %1, %25 : vector<8x4xf32>
    %27 = math.exp %26 : vector<8x4xf32>
    %cst_15 = arith.constant dense<0.000000e+00> : vector<8xf32>
    %28 = vector.multi_reduction <add>, %27, %cst_15 [1] : vector<8x4xf32> to vector<8xf32>
    %29 = vector.shape_cast %28 : vector<8xf32> to vector<8x1xf32>
    %30 = math.log %29 : vector<8x1xf32>
    %31 = arith.addf %30, %24 : vector<8x1xf32>
    %32 = arith.mulf %4, %1 : vector<8x4xf32>
    %cst_16 = arith.constant dense<0.000000e+00> : vector<8xf32>
    %33 = vector.multi_reduction <add>, %32, %cst_16 [1] : vector<8x4xf32> to vector<8xf32>
    %34 = vector.shape_cast %33 : vector<8xf32> to vector<8x1xf32>
    %35 = arith.subf %31, %34 : vector<8x1xf32>
    %36 = vector.shape_cast %35 : vector<8x1xf32> to vector<1x8x1xf32>
    %cst_17 = arith.constant dense<0.000000e+00> : vector<1xf32>
    %37 = vector.multi_reduction <add>, %36, %cst_17 [1, 2] : vector<1x8x1xf32> to vector<1xf32>
    %38 = vector.shape_cast %37 : vector<1xf32> to vector<1x1x1xf32>
    %39 = vector.extract %38[0, 0, 0] : f32 from vector<1x1x1xf32>
    %40 = arith.addf %22, %39 : f32
    %cst_18 = arith.constant 6.250000e-02 : f32
    %41 = arith.mulf %40, %cst_18 : f32
    %cst_19 = arith.constant dense<0.000000e+00> : vector<8x16xf32>
    %42 = tpu.matmul %4, %5, %cst_19 {dimension_numbers = #tpu.dot_dimension_numbers<[1], [0], [0], [1], [0, 0, 1, 1], [], []>} : vector<8x4xf32>, vector<4x16xf32>, vector<8x16xf32> -> vector<8x16xf32>
    %43 = arith.mulf %2, %42 : vector<8x16xf32>
    %cst_20 = arith.constant 3.000000e-01 : f32
    %44 = vector.broadcast %cst_20 : f32 to vector<8x16xf32>
    %45 = arith.subf %44, %43 : vector<8x16xf32>
    %cst_21 = arith.constant 0.000000e+00 : f32
    %46 = vector.broadcast %cst_21 : f32 to vector<8x16xf32>
    %47 = arith.maximumf %45, %46 : vector<8x16xf32>
    %48 = vector.shape_cast %47 : vector<8x16xf32> to vector<1x8x16xf32>
    %cst_22 = arith.constant dense<0.000000e+00> : vector<1xf32>
    %49 = vector.multi_reduction <add>, %48, %cst_22 [1, 2] : vector<1x8x16xf32> to vector<1xf32>
    %50 = vector.shape_cast %49 : vector<1xf32> to vector<1x1x1xf32>
    %51 = vector.extract %50[0, 0, 0] : f32 from vector<1x1x1xf32>
    %52 = arith.mulf %3, %42 : vector<8x16xf32>
    %cst_23 = arith.constant 3.000000e-01 : f32
    %53 = vector.broadcast %cst_23 : f32 to vector<8x16xf32>
    %54 = arith.subf %53, %52 : vector<8x16xf32>
    %cst_24 = arith.constant 0.000000e+00 : f32
    %55 = vector.broadcast %cst_24 : f32 to vector<8x16xf32>
    %56 = arith.maximumf %54, %55 : vector<8x16xf32>
    %57 = vector.shape_cast %56 : vector<8x16xf32> to vector<1x8x16xf32>
    %cst_25 = arith.constant dense<0.000000e+00> : vector<1xf32>
    %58 = vector.multi_reduction <add>, %57, %cst_25 [1, 2] : vector<1x8x16xf32> to vector<1xf32>
    %59 = vector.shape_cast %58 : vector<1xf32> to vector<1x1x1xf32>
    %60 = vector.extract %59[0, 0, 0] : f32 from vector<1x1x1xf32>
    %61 = arith.addf %51, %60 : f32
    %cst_26 = arith.constant 7.812500e-03 : f32
    %62 = arith.mulf %61, %cst_26 : f32
    %cst_27 = arith.constant 0.000000e+00 : f32
    %63 = vector.broadcast %cst_27 : f32 to vector<8x16xf32>
    %64 = arith.cmpf olt, %2, %63 : vector<8x16xf32>
    %65 = arith.extui %64 : vector<8x16xi1> to vector<8x16xi32>
    %66 = arith.sitofp %65 : vector<8x16xi32> to vector<8x16xf32>
    %67 = vector.shape_cast %66 : vector<8x16xf32> to vector<1x8x16xf32>
    %cst_28 = arith.constant dense<0.000000e+00> : vector<1xf32>
    %68 = vector.multi_reduction <add>, %67, %cst_28 [1, 2] : vector<1x8x16xf32> to vector<1xf32>
    %69 = vector.shape_cast %68 : vector<1xf32> to vector<1x1x1xf32>
    %70 = vector.extract %69[0, 0, 0] : f32 from vector<1x1x1xf32>
    %cst_29 = arith.constant 0.000000e+00 : f32
    %71 = vector.broadcast %cst_29 : f32 to vector<8x16xf32>
    %72 = arith.cmpf olt, %3, %71 : vector<8x16xf32>
    %73 = arith.extui %72 : vector<8x16xi1> to vector<8x16xi32>
    %74 = arith.sitofp %73 : vector<8x16xi32> to vector<8x16xf32>
    %75 = vector.shape_cast %74 : vector<8x16xf32> to vector<1x8x16xf32>
    %cst_30 = arith.constant dense<0.000000e+00> : vector<1xf32>
    %76 = vector.multi_reduction <add>, %75, %cst_30 [1, 2] : vector<1x8x16xf32> to vector<1xf32>
    %77 = vector.shape_cast %76 : vector<1xf32> to vector<1x1x1xf32>
    %78 = vector.extract %77[0, 0, 0] : f32 from vector<1x1x1xf32>
    %79 = arith.addf %70, %78 : f32
    %cst_31 = arith.constant 0.000000e+00 : f32
    %80 = vector.broadcast %cst_31 : f32 to vector<8x16xf32>
    %81 = arith.cmpf ogt, %2, %80 : vector<8x16xf32>
    %82 = arith.extui %81 : vector<8x16xi1> to vector<8x16xi32>
    %83 = arith.sitofp %82 : vector<8x16xi32> to vector<8x16xf32>
    %84 = vector.shape_cast %83 : vector<8x16xf32> to vector<1x8x16xf32>
    %cst_32 = arith.constant dense<0.000000e+00> : vector<1xf32>
    %85 = vector.multi_reduction <add>, %84, %cst_32 [1, 2] : vector<1x8x16xf32> to vector<1xf32>
    %86 = vector.shape_cast %85 : vector<1xf32> to vector<1x1x1xf32>
    %87 = vector.extract %86[0, 0, 0] : f32 from vector<1x1x1xf32>
    %cst_33 = arith.constant 0.000000e+00 : f32
    %88 = vector.broadcast %cst_33 : f32 to vector<8x16xf32>
    %89 = arith.cmpf ogt, %3, %88 : vector<8x16xf32>
    %90 = arith.extui %89 : vector<8x16xi1> to vector<8x16xi32>
    %91 = arith.sitofp %90 : vector<8x16xi32> to vector<8x16xf32>
    %92 = vector.shape_cast %91 : vector<8x16xf32> to vector<1x8x16xf32>
    %cst_34 = arith.constant dense<0.000000e+00> : vector<1xf32>
    %93 = vector.multi_reduction <add>, %92, %cst_34 [1, 2] : vector<1x8x16xf32> to vector<1xf32>
    %94 = vector.shape_cast %93 : vector<1xf32> to vector<1x1x1xf32>
    %95 = vector.extract %94[0, 0, 0] : f32 from vector<1x1x1xf32>
    %96 = arith.addf %87, %95 : f32
    %cst_35 = arith.constant 3.906250e-03 : f32
    %97 = arith.mulf %79, %cst_35 : f32
    %cst_36 = arith.constant 3.906250e-03 : f32
    %98 = arith.mulf %96, %cst_36 : f32
    %cst_37 = arith.constant 0.000000e+00 : f32
    %99 = arith.subf %cst_37, %97 : f32
    %100 = math.log %97 : f32
    %cst_38 = arith.constant 2.000000e+00 : f32
    %101 = math.log %cst_38 : f32
    %102 = arith.divf %100, %101 : f32
    %103 = arith.mulf %99, %102 : f32
    %104 = math.log %98 : f32
    %cst_39 = arith.constant 2.000000e+00 : f32
    %105 = math.log %cst_39 : f32
    %106 = arith.divf %104, %105 : f32
    %107 = arith.mulf %98, %106 : f32
    %108 = arith.addf %103, %107 : f32
    %109 = math.absf %108 : f32
    %cst_40 = arith.constant 1.000000e-01 : f32
    %110 = arith.mulf %cst_40, %62 : f32
    %111 = arith.addf %41, %110 : f32
    %cst_41 = arith.constant 1.000000e-01 : f32
    %112 = arith.mulf %cst_41, %109 : f32
    %113 = arith.addf %111, %112 : f32
    %c0_42 = arith.constant 0 : index
    %c0_43 = arith.constant 0 : index
    %114 = memref.load %arg9[%c0_42, %c0_43] : memref<1x1xf32, #tpu.memory_space<smem>>
    memref.store %113, %arg9[%c0_42, %c0_43] : memref<1x1xf32, #tpu.memory_space<smem>>
    %c0_44 = arith.constant 0 : index
    %c0_45 = arith.constant 0 : index
    %115 = vector.load %arg6[%c0_44, %c0_45] : memref<1x8xi32, #tpu.memory_space<vmem>>, vector<1x8xi32>
    %116 = tpu.iota {dimensions = array<i32: 0>} : vector<16x8xi32>
    %117 = vector.broadcast %115 : vector<1x8xi32> to vector<16x8xi32>
    %118 = arith.cmpi eq, %116, %117 : vector<16x8xi32>
    %119 = arith.extui %118 : vector<16x8xi1> to vector<16x8xi32>
    %120 = arith.sitofp %119 : vector<16x8xi32> to vector<16x8xf32>
    %cst_46 = arith.constant dense<0.000000e+00> : vector<16xf32>
    %121 = vector.multi_reduction <add>, %120, %cst_46 [1] : vector<16x8xf32> to vector<16xf32>
    %122 = vector.shape_cast %121 : vector<16xf32> to vector<16x1xf32>
    %cst_47 = arith.constant 0.000000e+00 : f32
    %123 = vector.broadcast %cst_47 : f32 to vector<16x1xf32>
    %124 = arith.cmpf ogt, %122, %123 : vector<16x1xf32>
    %cst_48 = arith.constant dense<0.000000e+00> : vector<16x16xf32>
    %125 = tpu.matmul %120, %3, %cst_48 {dimension_numbers = #tpu.dot_dimension_numbers<[1], [0], [0], [1], [0, 0, 1, 1], [], []>} : vector<16x8xf32>, vector<8x16xf32>, vector<16x16xf32> -> vector<16x16xf32>
    %cst_49 = arith.constant dense<0.000000e+00> : vector<16x4xf32>
    %126 = tpu.matmul %120, %4, %cst_49 {dimension_numbers = #tpu.dot_dimension_numbers<[1], [0], [0], [1], [0, 0, 1, 1], [], []>} : vector<16x8xf32>, vector<8x4xf32>, vector<16x4xf32> -> vector<16x4xf32>
    %c0_50 = arith.constant 0 : index
    %c0_51 = arith.constant 0 : index
    %127 = vector.load %arg7[%c0_50, %c0_51] : memref<16x16xf32, #tpu.memory_space<vmem>>, vector<16x16xf32>
    %128 = vector.shape_cast %124 : vector<16x1xi1> to vector<16x1xi1>
    %129 = vector.broadcast %128 : vector<16x1xi1> to vector<16x16xi1>
    %130 = arith.select %129, %125, %127 : vector<16x16xi1>, vector<16x16xf32>
    %c0_52 = arith.constant 0 : index
    %c0_53 = arith.constant 0 : index
    %131 = vector.load %arg10[%c0_52, %c0_53] : memref<16x16xf32, #tpu.memory_space<vmem>>, vector<16x16xf32>
    tpu.vector_store %arg10[%c0_52, %c0_53], %130 {strides = array<i32>} : memref<16x16xf32, #tpu.memory_space<vmem>>, vector<16x16xf32>,
    %c0_54 = arith.constant 0 : index
    %c0_55 = arith.constant 0 : index
    %132 = vector.load %arg8[%c0_54, %c0_55] : memref<16x4xf32, #tpu.memory_space<vmem>>, vector<16x4xf32>
    %133 = vector.shape_cast %124 : vector<16x1xi1> to vector<16x1xi1>
    %134 = vector.broadcast %133 : vector<16x1xi1> to vector<16x4xi1>
    %135 = arith.select %134, %126, %132 : vector<16x4xi1>, vector<16x4xf32>
    %c0_56 = arith.constant 0 : index
    %c0_57 = arith.constant 0 : index
    %136 = vector.load %arg11[%c0_56, %c0_57] : memref<16x4xf32, #tpu.memory_space<vmem>>, vector<16x4xf32>
    tpu.vector_store %arg11[%c0_56, %c0_57], %135 {strides = array<i32>} : memref<16x4xf32, #tpu.memory_space<vmem>>, vector<16x4xf32>,
    return
  }
}

</mosaic_0001>

<llo_original>
// kernel: _my_loss_forward.1
$region0: #{_my_loss_forward.1}
  #allocation0 [shape = 'u32[]', space=smem, size = 0x4, offset = 0x4, fixed_abs, tag = 'smem constant byte address 0x4 - core index']
  #allocation1 [shape = 'u32[144,128]{1,0:T(1,128)}', space=vmem, size = 0x12000, scoped, tag = 'internal scratch']
  %s0 = inlined_call_operand.vmem [shape: f32[8,4], index: 0, kind: input, shape index: {}]
  %s1 = inlined_call_operand.vmem [shape: f32[8,4], index: 1, kind: input, shape index: {}]
  %s2 = inlined_call_operand.vmem [shape: f32[8,16], index: 2, kind: input, shape index: {}]
  %s3 = inlined_call_operand.vmem [shape: f32[8,16], index: 3, kind: input, shape index: {}]
  %s4 = inlined_call_operand.vmem [shape: f32[8,4], index: 4, kind: input, shape index: {}]
  %s5 = inlined_call_operand.vmem [shape: f32[4,16], index: 5, kind: input, shape index: {}]
  %s6 = inlined_call_operand.vmem [shape: s32[1,8], index: 6, kind: input, shape index: {}]
  %s7 = inlined_call_operand.vmem [shape: f32[16,16], index: 7, kind: input, shape index: {}]
  %s8 = inlined_call_operand.vmem [shape: f32[16,4], index: 8, kind: input, shape index: {}]
  %s9 = inlined_call_operand.hbm [shape: f32[1,1], index: 9, kind: output, shape index: {0}]
  %s10 = inlined_call_operand.hbm [shape: f32[16,16], index: 10, kind: output, shape index: {1}]
  %s11 = inlined_call_operand.vmem [shape: f32[16,4], index: 11, kind: output, shape index: {2}]
  %12 = xla_tuple %s9, %s10, %s11
  %s13 = sld [smem:[#allocation0]]
  $region62: #{_my_loss_forward.1} parent=0
    _
  %s15 = ssub.s32 1, %s13
  %s16 = scalar_select 0, %s15, %s13
  $region1: #{_my_loss_forward.1} parent=0
    #allocation2 [shape = 'u8[512]{0}', space=smem, size = 0x200, scoped, tag = 'output window, operand 0, single buffered']
    #allocation3 [shape = 's32[1]{0}', space=sflag, size = 0x4, scoped, tag = 'scoped memory for _my_loss_forward.1']
    #allocation4 [shape = 's32[1]{0}', space=sflag, size = 0x4, scoped, tag = 'scoped memory for _my_loss_forward.1']
    #allocation5 [shape = 'u8[8192]{0}', space=vmem, size = 0x2000, scoped, tag = 'output window, operand 1, single buffered']
    %17 = vsyncpa [#allocation4], 0
    %18 = vsyncpa [#allocation3], 0
    // Predicated region
    $region2: #{_my_loss_forward.1} parent=1 // pred_check
      _
    $region3: #{_my_loss_forward.1} parent=1 // pred_check_branch
      %20 = sbr.rel (0) target = $region5
    $region4: #{_my_loss_forward.1} parent=1 // pred_region
      _
    $region5: #{_my_loss_forward.1} parent=1 // pred_fallthru
      _
    // Predicated region
    $region6: #{_my_loss_forward.1} parent=1 // pred_check
      _
    $region7: #{_my_loss_forward.1} parent=1 // pred_check_branch
      %22 = sbr.rel (0) target = $region9
    $region8: #{_my_loss_forward.1} parent=1 // pred_region
      _
    $region9: #{_my_loss_forward.1} parent=1 // pred_fallthru
      _
    // Predicated region
    $region10: #{_my_loss_forward.1} parent=1 // pred_check
      _
    $region11: #{_my_loss_forward.1} parent=1 // pred_check_branch
      %24 = sbr.rel (0) target = $region13
    $region12: #{_my_loss_forward.1} parent=1 // pred_region
      _
    $region13: #{_my_loss_forward.1} parent=1 // pred_fallthru
      _
    // Predicated region
    $region14: #{_my_loss_forward.1} parent=1 // pred_check
      _
    $region15: #{_my_loss_forward.1} parent=1 // pred_check_branch
      %26 = sbr.rel (0) target = $region17
    $region16: #{_my_loss_forward.1} parent=1 // pred_region
      _
    $region17: #{_my_loss_forward.1} parent=1 // pred_fallthru
      _
    // Predicated region
    $region18: #{_my_loss_forward.1} parent=1 // pred_check
      _
    $region19: #{_my_loss_forward.1} parent=1 // pred_check_branch
      %28 = sbr.rel (0) target = $region21
    $region20: #{_my_loss_forward.1} parent=1 // pred_region
      _
    $region21: #{_my_loss_forward.1} parent=1 // pred_fallthru
      _
    // Predicated region
    $region22: #{_my_loss_forward.1} parent=1 // pred_check
      _
    $region23: #{_my_loss_forward.1} parent=1 // pred_check_branch
      %30 = sbr.rel (0) target = $region25
    $region24: #{_my_loss_forward.1} parent=1 // pred_region
      _
    $region25: #{_my_loss_forward.1} parent=1 // pred_fallthru
      _
    // Predicated region
    $region26: #{_my_loss_forward.1} parent=1 // pred_check
      _
    $region27: #{_my_loss_forward.1} parent=1 // pred_check_branch
      %32 = sbr.rel (0) target = $region29
    $region28: #{_my_loss_forward.1} parent=1 // pred_region
      _
    $region29: #{_my_loss_forward.1} parent=1 // pred_fallthru
      _
    // Predicated region
    $region30: #{_my_loss_forward.1} parent=1 // pred_check
      _
    $region31: #{_my_loss_forward.1} parent=1 // pred_check_branch
      %34 = sbr.rel (0) target = $region33
    $region32: #{_my_loss_forward.1} parent=1 // pred_region
      _
    $region33: #{_my_loss_forward.1} parent=1 // pred_fallthru
      _
    // Predicated region
    $region34: #{_my_loss_forward.1} parent=1 // pred_check
      _
    $region35: #{_my_loss_forward.1} parent=1 // pred_check_branch
      %36 = sbr.rel (0) target = $region37
    $region36: #{_my_loss_forward.1} parent=1 // pred_region
      _
    $region37: #{_my_loss_forward.1} parent=1 // pred_fallthru
      _
    %v37 = vld [vmem:[%s0] sm:$0xff]
    %v38 = vld [vmem:[%s1] sm:$0xff]
    %v39 = vld [vmem:[%s2] sm:$0xff]
    %v40 = vld [vmem:[%s3] sm:$0xff]
    %v41 = vld [vmem:[%s4] sm:$0xff]
    %v42 = vld [vmem:[%s5] sm:$0xf]
    %vm43 = vcmask 31744
    %v44 = vsel %vm43, %v37, -inf
    %45 = vmax.xlane.f32.xlu0 %v44
    %v46 = vpop.xlane.xlu0 %45
    %v47 = vsub.f32 %v37, %v46
    %v48 = vmul.f32 %v47, 1.442695
    %v49 = vpow.pop %v48
    %v50 = vsel %vm43, %v49, 0.0
    %51 = vadd.xlane.f32.xlu0 %v50
    %v52 = vpop.xlane.xlu0 %51
    %v53 = vlog2.pop %v52
    %v54 = vmul.f32 %v53, 0.6931472
    %v55 = vadd.f32 %v54, %v46
    %v56 = vmul.f32 %v41, %v37
    %v57 = vsel %vm43, %v56, 0.0
    %58 = vadd.xlane.f32.xlu0 %v57
    %v59 = vpop.xlane.xlu0 %58
    %v60 = vsub.f32 %v55, %v59
    %vm61 = vcmask 7168
    %v62 = vsel %vm61, %v60, 0.0
    %63 = vadd.xlane.f32.xlu0 %v62
    %v64 = vpop.xlane.xlu0 %63
    %v65 = vrot.slane %v64, 4
    %v66 = vadd.f32 %v64, %v65
    %v67 = vrot.slane %v66, 2
    %v68 = vadd.f32 %v66, %v67
    %v69 = vrot.slane %v68, 1
    %v70 = vadd.f32 %v68, %v69
    %s71 = vtos %v70
    %v72 = vsel %vm43, %v38, -inf
    %73 = vmax.xlane.f32.xlu0 %v72
    %v74 = vpop.xlane.xlu0 %73
    %v75 = vsub.f32 %v38, %v74
    %v76 = vmul.f32 %v75, 1.442695
    %v77 = vpow.pop %v76
    %v78 = vsel %vm43, %v77, 0.0
    %79 = vadd.xlane.f32.xlu0 %v78
    %v80 = vpop.xlane.xlu0 %79
    %v81 = vlog2.pop %v80
    %v82 = vmul.f32 %v81, 0.6931472
    %v83 = vadd.f32 %v82, %v74
    %v84 = vmul.f32 %v41, %v38
    %v85 = vsel %vm43, %v84, 0.0
    %86 = vadd.xlane.f32.xlu0 %v85
    %v87 = vpop.xlane.xlu0 %86
    %v88 = vsub.f32 %v83, %v87
    %v89 = vsel %vm61, %v88, 0.0
    %90 = vadd.xlane.f32.xlu0 %v89
    %v91 = vpop.xlane.xlu0 %90
    %v92 = vrot.slane %v91, 4
    %v93 = vadd.f32 %v91, %v92
    %v94 = vrot.slane %v93, 2
    %v95 = vadd.f32 %v93, %v94
    %v96 = vrot.slane %v95, 1
    %v97 = vadd.f32 %v95, %v96
    %s98 = vtos %v97
    %s99 = sadd.f32 %s71, %s98
    %s100 = smul.f32 %s99, 0.0625
    %v102 = vsel %vm43, %v41, 0
    %vm104 = vcmask 1043456
    %v106 = vsel %vm104, %v42, 0
    %108 = vmatprep.subr.mxu0 0.0
    %109 = vmatpush1.msra.mxu0 %v106
    %110 = vmatprep.subr.mxu0 0.0
    %111 = vmatpush1.msra.mxu0 0.0
    %112 = vmatprep.subr.mxu0 0.0
    %113 = vmatpush1.msra.mxu0 0.0
    %114 = vmatprep.subr.mxu0 0.0
    %115 = vmatpush1.msra.mxu0 0.0
    %116 = vmatprep.subr.mxu0 0.0
    %117 = vmatpush1.msra.mxu0 0.0
    %118 = vmatprep.subr.mxu0 0.0
    %119 = vmatpush1.msra.mxu0 0.0
    %120 = vmatprep.subr.mxu0 0.0
    %121 = vmatpush1.msra.mxu0 0.0
    %122 = vmatprep.subr.mxu0 0.0
    %123 = vmatpush1.msra.mxu0 0.0
    %124 = vmatprep.subr.mxu0 0.0
    %125 = vmatpush1.msra.mxu0 0.0
    %126 = vmatprep.subr.mxu0 0.0
    %127 = vmatpush1.msra.mxu0 0.0
    %128 = vmatprep.subr.mxu0 0.0
    %129 = vmatpush1.msra.mxu0 0.0
    %130 = vmatprep.subr.mxu0 0.0
    %131 = vmatpush1.msra.mxu0 0.0
    %132 = vmatprep.subr.mxu0 0.0
    %133 = vmatpush1.msra.mxu0 0.0
    %134 = vmatprep.subr.mxu0 0.0
    %135 = vmatpush1.msra.mxu0 0.0
    %136 = vmatprep.subr.mxu0 0.0
    %137 = vmatpush1.msra.mxu0 0.0
    %138 = vmatprep.subr.mxu0 0.0
    %139 = vmatpush1.msra.mxu0 0.0
    %140 = vmatprep.subr.mxu0 0.0
    %141 = vmatpush1.msra.mxu0 0.0
    %142 = vmatprep.subr.mxu0 0.0
    %143 = vmatpush1.msra.mxu0 0.0
    %144 = vmatprep.subr.mxu0 0.0
    %145 = vmatpush1.msra.mxu0 0.0
    %146 = vmatprep.subr.mxu0 0.0
    %147 = vmatpush1.msra.mxu0 0.0
    %148 = vmatprep.subr.mxu0 0.0
    %149 = vmatpush1.msra.mxu0 0.0
    %150 = vmatprep.subr.mxu0 0.0
    %151 = vmatpush1.msra.mxu0 0.0
    %152 = vmatprep.subr.mxu0 0.0
    %153 = vmatpush1.msra.mxu0 0.0
    %154 = vmatprep.subr.mxu0 0.0
    %155 = vmatpush1.msra.mxu0 0.0
    %156 = vmatprep.subr.mxu0 0.0
    %157 = vmatpush1.msra.mxu0 0.0
    %158 = vmatprep.subr.mxu0 0.0
    %159 = vmatpush1.msra.mxu0 0.0
    %160 = vmatprep.subr.mxu0 0.0
    %161 = vmatpush1.msra.mxu0 0.0
    %162 = vmatprep.subr.mxu0 0.0
    %163 = vmatpush1.msra.mxu0 0.0
    %164 = vmatprep.subr.mxu0 0.0
    %165 = vmatpush1.msra.mxu0 0.0
    %166 = vmatprep.subr.mxu0 0.0
    %167 = vmatpush1.msra.mxu0 0.0
    %168 = vmatprep.subr.mxu0 0.0
    %169 = vmatpush1.msra.mxu0 0.0
    %170 = vmatprep.subr.mxu0 0.0
    %171 = vmatpush1.msra.mxu0 0.0
    %172 = vmatprep.mubr.f32.mxu0 0.0
    %173 = vmatmul.mubr.f32.gmra.mrb[0].mxu0 %v102
    %v174 = vpop.f32.mrb[0].mxu0
    %v175 = vadd.f32 0.0, %v174
    %v176 = vpop.f32.mrb[0].mxu0
    %177 = vdwg.mxu0
    %v178 = vmul.f32 %v39, %v175
    %v179 = vsub.f32 0.3, %v178
    %v180 = vmax.f32 %v179, 0.0
    %vm181 = vcmask 130048
    %v182 = vsel %vm181, %v180, 0.0
    %183 = vadd.xlane.f32.xlu0 %v182
    %v184 = vpop.xlane.xlu0 %183
    %v185 = vrot.slane %v184, 4
    %v186 = vadd.f32 %v184, %v185
    %v187 = vrot.slane %v186, 2
    %v188 = vadd.f32 %v186, %v187
    %v189 = vrot.slane %v188, 1
    %v190 = vadd.f32 %v188, %v189
    %s191 = vtos %v190
    %v192 = vmul.f32 %v40, %v175
    %v193 = vsub.f32 0.3, %v192
    %v194 = vmax.f32 %v193, 0.0
    %v195 = vsel %vm181, %v194, 0.0
    %196 = vadd.xlane.f32.xlu0 %v195
    %v197 = vpop.xlane.xlu0 %196
    %v198 = vrot.slane %v197, 4
    %v199 = vadd.f32 %v197, %v198
    %v200 = vrot.slane %v199, 2
    %v201 = vadd.f32 %v199, %v200
    %v202 = vrot.slane %v201, 1
    %v203 = vadd.f32 %v201, %v202
    %s204 = vtos %v203
    %s205 = sadd.f32 %s191, %s204
    %s206 = smul.f32 %s205, 0.0078125
    %vm207 = vcmp.lt.f32.partialorder %v39, 0.0
    %v208 = vsel %vm207, 1, 0
    %v209 = vcvt.s32.f32 %v208
    %v210 = vsel %vm181, %v209, 0.0
    %211 = vadd.xlane.f32.xlu0 %v210
    %v212 = vpop.xlane.xlu0 %211
    %v213 = vrot.slane %v212, 4
    %v214 = vadd.f32 %v212, %v213
    %v215 = vrot.slane %v214, 2
    %v216 = vadd.f32 %v214, %v215
    %v217 = vrot.slane %v216, 1
    %v218 = vadd.f32 %v216, %v217
    %s219 = vtos %v218
    %vm220 = vcmp.lt.f32.partialorder %v40, 0.0
    %v221 = vsel %vm220, 1, 0
    %v222 = vcvt.s32.f32 %v221
    %v223 = vsel %vm181, %v222, 0.0
    %224 = vadd.xlane.f32.xlu0 %v223
    %v225 = vpop.xlane.xlu0 %224
    %v226 = vrot.slane %v225, 4
    %v227 = vadd.f32 %v225, %v226
    %v228 = vrot.slane %v227, 2
    %v229 = vadd.f32 %v227, %v228
    %v230 = vrot.slane %v229, 1
    %v231 = vadd.f32 %v229, %v230
    %s232 = vtos %v231
    %s233 = sadd.f32 %s219, %s232
    %vm234 = vcmp.gt.f32.partialorder %v39, 0.0
    %v235 = vsel %vm234, 1, 0
    %v236 = vcvt.s32.f32 %v235
    %v237 = vsel %vm181, %v236, 0.0
    %238 = vadd.xlane.f32.xlu0 %v237
    %v239 = vpop.xlane.xlu0 %238
    %v240 = vrot.slane %v239, 4
    %v241 = vadd.f32 %v239, %v240
    %v242 = vrot.slane %v241, 2
    %v243 = vadd.f32 %v241, %v242
    %v244 = vrot.slane %v243, 1
    %v245 = vadd.f32 %v243, %v244
    %s246 = vtos %v245
    %vm247 = vcmp.gt.f32.partialorder %v40, 0.0
    %v248 = vsel %vm247, 1, 0
    %v249 = vcvt.s32.f32 %v248
    %v250 = vsel %vm181, %v249, 0.0
    %251 = vadd.xlane.f32.xlu0 %v250
    %v252 = vpop.xlane.xlu0 %251
    %v253 = vrot.slane %v252, 4
    %v254 = vadd.f32 %v252, %v253
    %v255 = vrot.slane %v254, 2
    %v256 = vadd.f32 %v254, %v255
    %v257 = vrot.slane %v256, 1
    %v258 = vadd.f32 %v256, %v257
    %s259 = vtos %v258
    %s260 = sadd.f32 %s246, %s259
    %s261 = smul.f32 %s233, 0.00390625
    %s262 = smul.f32 %s260, 0.00390625
    %s263 = ssub.f32 0.0, %s261
    %v264 = vstv %s261
    %v265 = vlog2.pop %v264
    %v266 = vmul.f32 %v265, 0.6931472
    %s267 = vtos %v266
    %v268 = vrcp.pop 0.6931472
    %s269 = vtos %v268
    %s270 = smul.f32 %s267, %s269
    %s271 = smul.f32 %s263, %s270
    %v272 = vstv %s262
    %v273 = vlog2.pop %v272
    %v274 = vmul.f32 %v273, 0.6931472
    %s275 = vtos %v274
    %v276 = vrcp.pop 0.6931472
    %s277 = vtos %v276
    %s278 = smul.f32 %s275, %s277
    %s279 = smul.f32 %s262, %s278
    %s280 = sadd.f32 %s271, %s279
    %s281 = sand.u32 2147483647, %s280
    %s282 = smul.f32 %s206, 0.1
    %s283 = sadd.f32 %s100, %s282
    %s284 = smul.f32 %s281, 0.1
    %s285 = sadd.f32 %s283, %s284
    %s286 = scalar_lea.smem [#allocation2], 0
    %287 = sst [smem:[%s286]] %s285
    %v288 = vld [vmem:[%s6] sm:$0x1]
    %v289 = vlaneseq
    %v290 = vshrl.u32 %v289, 7
    %v291 = vadd.s32 %v290, 8
    %v292 = vlaneseq
    %v293 = vshrl.u32 %v292, 7
    %v294 = vsub.s32 0, %v293
    %v295 = vrot.slane %v288, %v294
    %vm296 = vcmp.eq.s32.totalorder %v290, %v295
    %vm297 = vcmp.eq.s32.totalorder %v291, %v295
    %v298 = vsel %vm296, 1, 0
    %v299 = vsel %vm297, 1, 0
    %v300 = vcvt.s32.f32 %v298
    %v301 = vcvt.s32.f32 %v299
    %vm302 = vcmask 64512
    %v303 = vsel %vm302, %v300, 0.0
    %304 = vadd.xlane.f32.xlu0 %v303
    %v305 = vpop.xlane.xlu0 %304
    %v306 = vsel %vm302, %v301, 0.0
    %307 = vadd.xlane.f32.xlu0 %v306
    %v308 = vpop.xlane.xlu0 %307
    %vm309 = vcmp.gt.f32.partialorder %v305, 0.0
    %vm310 = vcmp.gt.f32.partialorder %v308, 0.0
    %v312 = vsel %vm302, %v300, 0
    %v315 = vsel %vm302, %v301, 0
    %317 = vmatprep.subr.mxu0 0.0
    %318 = vmatpush1.msra.mxu0 %v40
    %319 = vmatprep.subr.mxu0 0.0
    %320 = vmatpush1.msra.mxu0 0.0
    %321 = vmatprep.subr.mxu0 0.0
    %322 = vmatpush1.msra.mxu0 0.0
    %323 = vmatprep.subr.mxu0 0.0
    %324 = vmatpush1.msra.mxu0 0.0
    %325 = vmatprep.subr.mxu0 0.0
    %326 = vmatpush1.msra.mxu0 0.0
    %327 = vmatprep.subr.mxu0 0.0
    %328 = vmatpush1.msra.mxu0 0.0
    %329 = vmatprep.subr.mxu0 0.0
    %330 = vmatpush1.msra.mxu0 0.0
    %331 = vmatprep.subr.mxu0 0.0
    %332 = vmatpush1.msra.mxu0 0.0
    %333 = vmatprep.subr.mxu0 0.0
    %334 = vmatpush1.msra.mxu0 0.0
    %335 = vmatprep.subr.mxu0 0.0
    %336 = vmatpush1.msra.mxu0 0.0
    %337 = vmatprep.subr.mxu0 0.0
    %338 = vmatpush1.msra.mxu0 0.0
    %339 = vmatprep.subr.mxu0 0.0
    %340 = vmatpush1.msra.mxu0 0.0
    %341 = vmatprep.subr.mxu0 0.0
    %342 = vmatpush1.msra.mxu0 0.0
    %343 = vmatprep.subr.mxu0 0.0
    %344 = vmatpush1.msra.mxu0 0.0
    %345 = vmatprep.subr.mxu0 0.0
    %346 = vmatpush1.msra.mxu0 0.0
    %347 = vmatprep.subr.mxu0 0.0
    %348 = vmatpush1.msra.mxu0 0.0
    %349 = vmatprep.subr.mxu0 0.0
    %350 = vmatpush1.msra.mxu0 0.0
    %351 = vmatprep.subr.mxu0 0.0
    %352 = vmatpush1.msra.mxu0 0.0
    %353 = vmatprep.subr.mxu0 0.0
    %354 = vmatpush1.msra.mxu0 0.0
    %355 = vmatprep.subr.mxu0 0.0
    %356 = vmatpush1.msra.mxu0 0.0
    %357 = vmatprep.subr.mxu0 0.0
    %358 = vmatpush1.msra.mxu0 0.0
    %359 = vmatprep.subr.mxu0 0.0
    %360 = vmatpush1.msra.mxu0 0.0
    %361 = vmatprep.subr.mxu0 0.0
    %362 = vmatpush1.msra.mxu0 0.0
    %363 = vmatprep.subr.mxu0 0.0
    %364 = vmatpush1.msra.mxu0 0.0
    %365 = vmatprep.subr.mxu0 0.0
    %366 = vmatpush1.msra.mxu0 0.0
    %367 = vmatprep.subr.mxu0 0.0
    %368 = vmatpush1.msra.mxu0 0.0
    %369 = vmatprep.subr.mxu0 0.0
    %370 = vmatpush1.msra.mxu0 0.0
    %371 = vmatprep.subr.mxu0 0.0
    %372 = vmatpush1.msra.mxu0 0.0
    %373 = vmatprep.subr.mxu0 0.0
    %374 = vmatpush1.msra.mxu0 0.0
    %375 = vmatprep.subr.mxu0 0.0
    %376 = vmatpush1.msra.mxu0 0.0
    %377 = vmatprep.subr.mxu0 0.0
    %378 = vmatpush1.msra.mxu0 0.0
    %379 = vmatprep.subr.mxu0 0.0
    %380 = vmatpush1.msra.mxu0 0.0
    %381 = vmatprep.mubr.f32.mxu0 0.0
    %382 = vmatmul.mubr.f32.gmra.mrb[0].mxu0 %v312
    %v383 = vpop.f32.mrb[0].mxu0
    %v384 = vadd.f32 0.0, %v383
    %v385 = vpop.f32.mrb[0].mxu0
    %386 = vmatprep.mubr.f32.mxu0 0.0
    %387 = vmatmul.mubr.f32.gmra.mrb[0].mxu0 %v315
    %v388 = vpop.f32.mrb[0].mxu0
    %v389 = vadd.f32 0.0, %v388
    %v390 = vpop.f32.mrb[0].mxu0
    %391 = vdwg.mxu0
    %392 = vmatprep.subr.mxu0 0.0
    %393 = vmatpush1.msra.mxu0 %v41
    %394 = vmatprep.subr.mxu0 0.0
    %395 = vmatpush1.msra.mxu0 0.0
    %396 = vmatprep.subr.mxu0 0.0
    %397 = vmatpush1.msra.mxu0 0.0
    %398 = vmatprep.subr.mxu0 0.0
    %399 = vmatpush1.msra.mxu0 0.0
    %400 = vmatprep.subr.mxu0 0.0
    %401 = vmatpush1.msra.mxu0 0.0
    %402 = vmatprep.subr.mxu0 0.0
    %403 = vmatpush1.msra.mxu0 0.0
    %404 = vmatprep.subr.mxu0 0.0
    %405 = vmatpush1.msra.mxu0 0.0
    %406 = vmatprep.subr.mxu0 0.0
    %407 = vmatpush1.msra.mxu0 0.0
    %408 = vmatprep.subr.mxu0 0.0
    %409 = vmatpush1.msra.mxu0 0.0
    %410 = vmatprep.subr.mxu0 0.0
    %411 = vmatpush1.msra.mxu0 0.0
    %412 = vmatprep.subr.mxu0 0.0
    %413 = vmatpush1.msra.mxu0 0.0
    %414 = vmatprep.subr.mxu0 0.0
    %415 = vmatpush1.msra.mxu0 0.0
    %416 = vmatprep.subr.mxu0 0.0
    %417 = vmatpush1.msra.mxu0 0.0
    %418 = vmatprep.subr.mxu0 0.0
    %419 = vmatpush1.msra.mxu0 0.0
    %420 = vmatprep.subr.mxu0 0.0
    %421 = vmatpush1.msra.mxu0 0.0
    %422 = vmatprep.subr.mxu0 0.0
    %423 = vmatpush1.msra.mxu0 0.0
    %424 = vmatprep.subr.mxu0 0.0
    %425 = vmatpush1.msra.mxu0 0.0
    %426 = vmatprep.subr.mxu0 0.0
    %427 = vmatpush1.msra.mxu0 0.0
    %428 = vmatprep.subr.mxu0 0.0
    %429 = vmatpush1.msra.mxu0 0.0
    %430 = vmatprep.subr.mxu0 0.0
    %431 = vmatpush1.msra.mxu0 0.0
    %432 = vmatprep.subr.mxu0 0.0
    %433 = vmatpush1.msra.mxu0 0.0
    %434 = vmatprep.subr.mxu0 0.0
    %435 = vmatpush1.msra.mxu0 0.0
    %436 = vmatprep.subr.mxu0 0.0
    %437 = vmatpush1.msra.mxu0 0.0
    %438 = vmatprep.subr.mxu0 0.0
    %439 = vmatpush1.msra.mxu0 0.0
    %440 = vmatprep.subr.mxu0 0.0
    %441 = vmatpush1.msra.mxu0 0.0
    %442 = vmatprep.subr.mxu0 0.0
    %443 = vmatpush1.msra.mxu0 0.0
    %444 = vmatprep.subr.mxu0 0.0
    %445 = vmatpush1.msra.mxu0 0.0
    %446 = vmatprep.subr.mxu0 0.0
    %447 = vmatpush1.msra.mxu0 0.0
    %448 = vmatprep.subr.mxu0 0.0
    %449 = vmatpush1.msra.mxu0 0.0
    %450 = vmatprep.subr.mxu0 0.0
    %451 = vmatpush1.msra.mxu0 0.0
    %452 = vmatprep.subr.mxu0 0.0
    %453 = vmatpush1.msra.mxu0 0.0
    %454 = vmatprep.subr.mxu0 0.0
    %455 = vmatpush1.msra.mxu0 0.0
    %456 = vmatprep.mubr.f32.mxu0 0.0
    %457 = vmatmul.mubr.f32.gmra.mrb[0].mxu0 %v312
    %v458 = vpop.f32.mrb[0].mxu0
    %v459 = vadd.f32 0.0, %v458
    %v460 = vpop.f32.mrb[0].mxu0
    %461 = vmatprep.mubr.f32.mxu0 0.0
    %462 = vmatmul.mubr.f32.gmra.mrb[0].mxu0 %v315
    %v463 = vpop.f32.mrb[0].mxu0
    %v464 = vadd.f32 0.0, %v463
    %v465 = vpop.f32.mrb[0].mxu0
    %466 = vdwg.mxu0
    %v467 = vld [vmem:[%s7] sm:$0xff]
    %v468 = vld [vmem:[%s7 + $0x8] sm:$0xff]
    %v469 = vsel %vm309, 1, 0
    %v470 = vsel %vm310, 1, 0
    %vm471 = vcmp.eq.s32.totalorder %v469, 1
    %vm472 = vcmp.eq.s32.totalorder %v470, 1
    %v473 = vsel %vm471, %v384, %v467
    %v474 = vsel %vm472, %v389, %v468
    %475 = vst.msk [vmem:[#allocation5] sm:$0xff] %vm181, %v473
    %476 = vst.msk [vmem:[#allocation5 + $0x8] sm:$0xff] %vm181, %v474
    %v477 = vld [vmem:[%s8] sm:$0xff]
    %v478 = vld [vmem:[%s8 + $0x8] sm:$0xff]
    %v479 = vsel %vm471, %v459, %v477
    %v480 = vsel %vm472, %v464, %v478
    %481 = vst.msk [vmem:[%s11] sm:$0xff] %vm43, %v479
    %482 = vst.msk [vmem:[%s11 + $0x8] sm:$0xff] %vm43, %v480
    // Predicated region
    $region38: #{_my_loss_forward.1} parent=1 // pred_check
      _
    $region39: #{_my_loss_forward.1} parent=1 // pred_check_branch
      %484 = sbr.rel (0) target = $region41
    $region40: #{_my_loss_forward.1} parent=1 // pred_region
      %s486 = ssub.s32 16, 16
      %487 = vsyncadd [#allocation4], %s486
      %490 = dma.smem_to_hbm [#allocation2], 16, %s9, [#allocation4]
    $region41: #{_my_loss_forward.1} parent=1 // pred_fallthru
      _
    // Predicated region
    $region42: #{_my_loss_forward.1} parent=1 // pred_check
      _
    $region43: #{_my_loss_forward.1} parent=1 // pred_check_branch
      %492 = sbr.rel (0) target = $region45
    $region44: #{_my_loss_forward.1} parent=1 // pred_region
      %s494 = ssub.s32 256, 256
      %495 = vsyncadd [#allocation3], %s494
      %s496 = sshll.u32 [#allocation5], 4
      %s497 = int_to_ptr.vmem [resolvable:$true] %s496
      %502 = dma.vmem_to_hbm [thread:$0]  %s497, 256, %s10, [#allocation3], 128, 128, 8
    $region45: #{_my_loss_forward.1} parent=1 // pred_fallthru
      _
    // Predicated region
    $region46: #{_my_loss_forward.1} parent=1 // pred_check
      _
    $region47: #{_my_loss_forward.1} parent=1 // pred_check_branch
      %504 = sbr.rel (0) target = $region49
    $region48: #{_my_loss_forward.1} parent=1 // pred_region
      _
    $region49: #{_my_loss_forward.1} parent=1 // pred_fallthru
      _
    // Predicated region
    $region50: #{_my_loss_forward.1} parent=1 // pred_check
      _
    $region51: #{_my_loss_forward.1} parent=1 // pred_check_branch
      %506 = sbr.rel (0) target = $region53
    $region52: #{_my_loss_forward.1} parent=1 // pred_region
      %507 = dma.done [#allocation4], 16
    $region53: #{_my_loss_forward.1} parent=1 // pred_fallthru
      _
    // Predicated region
    $region54: #{_my_loss_forward.1} parent=1 // pred_check
      _
    $region55: #{_my_loss_forward.1} parent=1 // pred_check_branch
      %509 = sbr.rel (0) target = $region57
    $region56: #{_my_loss_forward.1} parent=1 // pred_region
      %510 = dma.done [#allocation3], 256
    $region57: #{_my_loss_forward.1} parent=1 // pred_fallthru
      _
    // Predicated region
    $region58: #{_my_loss_forward.1} parent=1 // pred_check
      _
    $region59: #{_my_loss_forward.1} parent=1 // pred_check_branch
      %512 = sbr.rel (0) target = $region61
    $region60: #{_my_loss_forward.1} parent=1 // pred_region
      _
    $region61: #{_my_loss_forward.1} parent=1 // pred_fallthru
      _
    %513 = sfence
    %514 = vsyncpa [#allocation3], 1
    %515 = vsyncpa [#allocation4], 1

</llo_original>
